<compile_context>
chip_gen: v6e
topology: v6e:2x2x1
jax: 0.10.0
libtpu: 0.0.40
codegen_flags: <defaults>
</compile_context>

<pallas_src>
import numpy as np
import jax
import jax.numpy as jnp
from jax.experimental import pallas as pl
from jax.experimental.pallas import tpu as pltpu

_LANE = 128
_TARGET_BLOCK_BYTES = 2 * 1024 * 1024   # ~2 MiB per block per buffer


def _h_swish_kernel(x_ref, o_ref):
    x = x_ref[...]
    # x * relu6(x + 3) / 6   (one add, one clip, two muls -> pure VPU)
    o_ref[...] = x * jnp.clip(x + 3.0, 0.0, 6.0) * (1.0 / 6.0)


def _min_sublanes(dtype):
    """Minimum second-to-last block dim for this dtype's sublane packing."""
    itemsize = jnp.dtype(dtype).itemsize
    return max(8, 8 * (4 // max(itemsize, 1)))   # f32->8, bf16->16, int8/fp8->32


def h_swish(x):
    """Elementwise h_swish over an arbitrarily shaped array (lane-dense slab)."""
    orig_shape, dtype, n = x.shape, x.dtype, x.size
    itemsize = jnp.dtype(dtype).itemsize
    min_sub = _min_sublanes(dtype)

    flat = jnp.ravel(x)

    # Pick the widest lane-dense last dim (large multiple of 128) that divides
    # n, so the common case needs no host-side padding copy at all.
    lane_width = None
    for w in (8192, 4096, 2048, 1024, 512, 256, 128):
        if n % w == 0:
            lane_width = w
            break
    pad = 0
    if lane_width is None:
        # Uncommon fallback: pad the tail up to one 128-lane row.
        # TODO(synk): could handle the ragged tail with a masked store in-kernel
        # instead of a concatenate, but this path is rare for conv activations.
        lane_width = _LANE
        pad = (-n) % lane_width
        flat = jnp.concatenate([flat, jnp.zeros((pad,), dtype)])

    rows = flat.size // lane_width
    slab = flat.reshape(rows, lane_width)

    # ~2 MiB blocks, rows rounded to the dtype's sublane packing.
    row_bytes = lane_width * itemsize
    block_rows = max(min_sub, (_TARGET_BLOCK_BYTES // row_bytes) // min_sub * min_sub)
    if block_rows >= rows:
        block_rows = rows                        # single block == full array dims
    # Keep at least 2 grid steps when there is enough data so the "parallel"
    # axis actually spans both TensorCores on v7x.
    if pl.cdiv(rows, block_rows) == 1 and rows >= 2 * min_sub:
        half = pl.cdiv(rows, 2)
        block_rows = ((half + min_sub - 1) // min_sub) * min_sub

    grid = (pl.cdiv(rows, block_rows),)

    out = pl.pallas_call(
        _h_swish_kernel,
        out_shape=jax.ShapeDtypeStruct((rows, lane_width), dtype),
        grid_spec=pltpu.PrefetchScalarGridSpec(
            num_scalar_prefetch=0,
            grid=grid,
            in_specs=[pl.BlockSpec((block_rows, lane_width), lambda i: (i, 0))],
            out_specs=pl.BlockSpec((block_rows, lane_width), lambda i: (i, 0)),
        ),
        compiler_params=pltpu.CompilerParams(
            dimension_semantics=("parallel",)),   # v7x: the 2 TCs split the blocks
    )(slab)

    out = jnp.ravel(out)
    if pad:
        out = out[:n]
    return out.reshape(orig_shape)


def reference_h_swish(x):
    """Pure-JAX mirror of the PyTorch module: x * ReLU6(x + 3) / 6."""
    return x * jnp.clip(x + 3.0, 0.0, 6.0) / 6.0


if __name__ == "__main__":
    key = jax.random.PRNGKey(0)
    B, C, H, W = 2, 4, 16, 16
    # scale so values straddle the [-3, 3] clip region of relu6(x + 3)
    x = 4.0 * jax.random.normal(key, (B, C, H, W), jnp.float32)

    out = jax.block_until_ready(h_swish(x))
    ref = jax.block_until_ready(reference_h_swish(x))

    assert out.shape == (B, C, H, W)
    if not np.allclose(np.asarray(out), np.asarray(ref), rtol=1e-6, atol=1e-6):
        raise AssertionError(
            "mismatch vs reference: max abs diff = "
            f"{np.max(np.abs(np.asarray(out) - np.asarray(ref)))}")
    print("KERNEL_OK")
</pallas_src>

<mosaic_0001>
module attributes {stable_mosaic.version = 11 : i64} {
  func.func @_h_swish_kernel(%arg0: i32, %arg1: memref<1x2048xf32, #tpu.memory_space<vmem>>, %arg2: memref<1x2048xf32, #tpu.memory_space<vmem>>) attributes {dimension_semantics = [#tpu.dimension_semantics<parallel>], iteration_bounds = array<i64: 1>, scalar_prefetch = 0 : i64, scratch_operands = 0 : i64, tpu.core_type = #tpu.core_type<tc>, window_params = [{transform_indices = @transform_0, window_bounds = array<i64: 1, 2048>}, {transform_indices = @transform_1, window_bounds = array<i64: 1, 2048>}]} {
    %c0 = arith.constant 0 : index
    %c0_0 = arith.constant 0 : index
    %0 = vector.load %arg1[%c0, %c0_0] : memref<1x2048xf32, #tpu.memory_space<vmem>>, vector<1x2048xf32>
    %cst = arith.constant 3.000000e+00 : f32
    %1 = vector.broadcast %cst : f32 to vector<1x2048xf32>
    %2 = arith.addf %0, %1 : vector<1x2048xf32>
    %cst_1 = arith.constant 0.000000e+00 : f32
    %cst_2 = arith.constant 6.000000e+00 : f32
    %3 = vector.broadcast %cst_1 : f32 to vector<1x2048xf32>
    %4 = arith.maximumf %3, %2 : vector<1x2048xf32>
    %5 = vector.broadcast %cst_2 : f32 to vector<1x2048xf32>
    %6 = arith.minimumf %5, %4 : vector<1x2048xf32>
    %7 = arith.mulf %0, %6 : vector<1x2048xf32>
    %cst_3 = arith.constant 0.166666672 : f32
    %8 = vector.broadcast %cst_3 : f32 to vector<1x2048xf32>
    %9 = arith.mulf %7, %8 : vector<1x2048xf32>
    %c0_4 = arith.constant 0 : index
    %c0_5 = arith.constant 0 : index
    %10 = vector.load %arg2[%c0_4, %c0_5] : memref<1x2048xf32, #tpu.memory_space<vmem>>, vector<1x2048xf32>
    tpu.vector_store %arg2[%c0_4, %c0_5], %9 {strides = array<i32>} : memref<1x2048xf32, #tpu.memory_space<vmem>>, vector<1x2048xf32>,
    return
  }
  func.func @transform_0(%arg0: i32) -> (i32, i32) {
    %c0_i32 = arith.constant 0 : i32
    %c0_i32_0 = arith.constant 0 : i32
    return %arg0, %c0_i32 : i32, i32
  }
  func.func @transform_1(%arg0: i32) -> (i32, i32) {
    %c0_i32 = arith.constant 0 : i32
    %c0_i32_0 = arith.constant 0 : i32
    return %arg0, %c0_i32 : i32, i32
  }
}

</mosaic_0001>

<llo_original>
// kernel: tpu_custom_call.1
$region0: #{tpu_custom_call.1}
  #allocation0 [shape = 'u32[]', space=smem, size = 0x4, offset = 0x4, fixed_abs, tag = 'smem constant byte address 0x4 - core index']
  #allocation1 [shape = 'u32[144,128]{1,0:T(1,128)}', space=vmem, size = 0x12000, scoped, tag = 'internal scratch']
  %s0 = inlined_call_operand.hbm [shape: f32[1,2048], index: 0, kind: input, shape index: {}]
  %s1 = inlined_call_operand.hbm [shape: f32[1,2048], index: 1, kind: output, shape index: {}]
  %s2 = sld [smem:[#allocation0]]
  $region18: #{tpu_custom_call.1} parent=0
    _
  %s4 = ssub.s32 1, %s2
  %s5 = scalar_select 0, %s4, %s2
  $region1: #{tpu_custom_call.1} parent=0
    #allocation2 [shape = 'u8[8192]{0}', space=vmem, size = 0x2000, scoped, tag = 'input window, operand 0, single buffered']
    #allocation3 [shape = 's32[1]{0}', space=sflag, size = 0x4, scoped, tag = 'scoped memory for tpu_custom_call.1']
    #allocation4 [shape = 's32[1]{0}', space=sflag, size = 0x4, scoped, tag = 'scoped memory for tpu_custom_call.1']
    #allocation5 [shape = 'u8[8192]{0}', space=vmem, size = 0x2000, scoped, tag = 'output window, operand 0, single buffered']
    %6 = vsyncpa [#allocation3], 0
    %7 = vsyncpa [#allocation4], 0
    // Predicated region
    $region2: #{tpu_custom_call.1} parent=1 // pred_check
      _
    $region3: #{tpu_custom_call.1} parent=1 // pred_check_branch
      %9 = sbr.rel (0) target = $region5
    $region4: #{tpu_custom_call.1} parent=1 // pred_region
      %s11 = ssub.s32 256, 256
      %12 = vsyncadd [#allocation3], %s11
      %s14 = sshll.u32 [#allocation2], 4
      %s15 = int_to_ptr.vmem [resolvable:$true] %s14
      %17 = dma.hbm_to_vmem [thread:$0]  %s0, 256, %s15, [#allocation3]
    $region5: #{tpu_custom_call.1} parent=1 // pred_fallthru
      _
    // Predicated region
    $region6: #{tpu_custom_call.1} parent=1 // pred_check
      _
    $region7: #{tpu_custom_call.1} parent=1 // pred_check_branch
      %19 = sbr.rel (0) target = $region9
    $region8: #{tpu_custom_call.1} parent=1 // pred_region
      %20 = dma.done [#allocation3], 256
    $region9: #{tpu_custom_call.1} parent=1 // pred_fallthru
      _
    %v21 = vld [vmem:[#allocation2] sm:$0xff]
    %v22 = vld [vmem:[#allocation2 + $0x8] sm:$0xff]
    %v23 = vadd.f32 %v21, 3.0
    %v24 = vadd.f32 %v22, 3.0
    %v25 = vmax.f32 %v23, 0.0
    %v26 = vmax.f32 %v24, 0.0
    %v27 = vmin.f32 %v25, 6.0
    %v28 = vmin.f32 %v26, 6.0
    %v29 = vmul.f32 %v21, %v27
    %v30 = vmul.f32 %v22, %v28
    %v31 = vmul.f32 %v29, 0.16666667
    %v32 = vmul.f32 %v30, 0.16666667
    %33 = vst [vmem:[#allocation5] sm:$0xff] %v31
    %34 = vst [vmem:[#allocation5 + $0x8] sm:$0xff] %v32
    // Predicated region
    $region10: #{tpu_custom_call.1} parent=1 // pred_check
      _
    $region11: #{tpu_custom_call.1} parent=1 // pred_check_branch
      %36 = sbr.rel (0) target = $region13
    $region12: #{tpu_custom_call.1} parent=1 // pred_region
      %s38 = ssub.s32 256, 256
      %39 = vsyncadd [#allocation4], %s38
      %s41 = sshll.u32 [#allocation5], 4
      %s42 = int_to_ptr.vmem [resolvable:$true] %s41
      %44 = dma.vmem_to_hbm [thread:$0]  %s42, 256, %s1, [#allocation4]
    $region13: #{tpu_custom_call.1} parent=1 // pred_fallthru
      _
    // Predicated region
    $region14: #{tpu_custom_call.1} parent=1 // pred_check
      _
    $region15: #{tpu_custom_call.1} parent=1 // pred_check_branch
      %46 = sbr.rel (0) target = $region17
    $region16: #{tpu_custom_call.1} parent=1 // pred_region
      %47 = dma.done [#allocation4], 256
    $region17: #{tpu_custom_call.1} parent=1 // pred_fallthru
      _
    %48 = vsyncpa [#allocation3], 1
    %49 = vsyncpa [#allocation4], 1

</llo_original>
